<compile_context>
chip_gen: v7x
topology: tpu7x:2x2x1
jax: 0.10.0
libtpu: 0.0.40
codegen_flags: <defaults>
</compile_context>

<pallas_src>
import functools

import jax
import jax.numpy as jnp
from jax import lax
from jax.experimental import pallas as pl
from jax.experimental.pallas import tpu as pltpu


def _round_up(x, m):
    return ((x + m - 1) // m) * m


def _critic_kernel(x_ref, w1_ref, b1_ref, w2_ref, b2_ref, w3_ref, b3_ref, o_ref):
    # x:  (tb, S)      w1: (S, H)   b1: (1, H)
    # w2: (H, H)       b2: (1, H)
    # w3: (1, H)       b3: (1, 1)
    # o:  (1, tb)   <- values along lanes (lane-dense store)
    x = x_ref[...]
    b1 = b1_ref[...]          # hoisted bias reads (read once per grid step)
    b2 = b2_ref[...]
    w3 = w3_ref[...]
    b3 = b3_ref[...]          # (1, 1), broadcasts against (1, tb)

    h1 = jnp.dot(x, w1_ref[...], preferred_element_type=jnp.float32) + b1
    h1 = jnp.maximum(h1, 0.0)

    h2 = jnp.dot(h1, w2_ref[...], preferred_element_type=jnp.float32) + b2
    h2 = jnp.maximum(h2, 0.0)

    # Layer 3: contract hidden of w3 (1,H) with hidden of h2 (tb,H) -> (1, tb).
    # NT matmul: full N=tb width on the MXU, output already lane-dense.
    v = lax.dot_general(
        w3, h2,
        dimension_numbers=(((1,), (1,)), ((), ())),
        preferred_element_type=jnp.float32,
    ) + b3

    o_ref[...] = v.astype(o_ref.dtype)


@functools.partial(jax.jit, static_argnames=("block_b",))
def critic_forward(state, params, block_b=1024):
    """state: [B, state_dim] float32 -> value: [B, 1] float32."""
    w1, b1, w2, b2, w3, b3 = params
    B, state_dim = state.shape
    hidden_dim = w1.shape[1]

    # Effective batch tile: as large as requested but no larger than the
    # (8-padded) batch; always a multiple of 8 (sublane granularity).
    tb = min(block_b, _round_up(B, 8))
    tb = _round_up(tb, 8)
    b_pad = _round_up(B, tb)
    if b_pad != B:
        state = jnp.pad(state, ((0, b_pad - B), (0, 0)))

    grid = (b_pad // tb,)

    # Weights / biases use full-array blocks (constant index -> VMEM-resident).
    def full(shape):
        return pl.BlockSpec(shape, lambda i: (0, 0))

    flops = 2 * b_pad * (state_dim * hidden_dim + hidden_dim * hidden_dim + hidden_dim)
    bytes_accessed = (
        b_pad * state_dim * 4            # state in
        + b_pad * 4                      # values out
        + (state_dim * hidden_dim + hidden_dim
           + hidden_dim * hidden_dim + hidden_dim
           + hidden_dim + 1) * 4         # weights + biases
    )

    out = pl.pallas_call(
        _critic_kernel,
        out_shape=jax.ShapeDtypeStruct((1, b_pad), jnp.float32),
        grid_spec=pltpu.PrefetchScalarGridSpec(
            num_scalar_prefetch=0,
            grid=grid,
            in_specs=[
                pl.BlockSpec((tb, state_dim), lambda i: (i, 0)),   # state tile
                full((state_dim, hidden_dim)),                      # w1
                full((1, hidden_dim)),                              # b1
                full((hidden_dim, hidden_dim)),                     # w2
                full((1, hidden_dim)),                              # b2
                full((1, hidden_dim)),                              # w3 (row)
                full((1, 1)),                                       # b3
            ],
            out_specs=pl.BlockSpec((1, tb), lambda i: (0, i)),      # lane-dense values
        ),
        compiler_params=pltpu.CompilerParams(
            dimension_semantics=("parallel",),   # v7x: shard batch tiles over 2 TCs
        ),
        cost_estimate=pl.CostEstimate(
            flops=flops, transcendentals=0, bytes_accessed=bytes_accessed,
        ),
    )(state, w1, b1, w2, b2, w3, b3)

    # Wrapper-side layout plumbing back to the PyTorch [B, 1] shape.
    return out[0, :B].reshape(B, 1)


def init_critic_params(key, state_dim, hidden_dim):
    """Deterministic init mimicking PyTorch Linear default (uniform +-1/sqrt(fan_in)).

    w1/w2 are stored [in, out]; w3 is stored [1, hidden] (PyTorch's [out, in]).
    """
    k1, k2, k3, k4, k5, k6 = jax.random.split(key, 6)

    def lin(kw, kb, fan_in, w_shape, b_shape):
        bound = 1.0 / jnp.sqrt(fan_in)
        w = jax.random.uniform(kw, w_shape, jnp.float32, -bound, bound)
        b = jax.random.uniform(kb, b_shape, jnp.float32, -bound, bound)
        return w, b

    w1, b1 = lin(k1, k2, state_dim, (state_dim, hidden_dim), (1, hidden_dim))
    w2, b2 = lin(k3, k4, hidden_dim, (hidden_dim, hidden_dim), (1, hidden_dim))
    w3, b3 = lin(k5, k6, hidden_dim, (1, hidden_dim), (1, 1))
    return (w1, b1, w2, b2, w3, b3)


def critic_reference(state, params):
    """Pure-JAX reference of the PyTorch forward pass (f32, highest precision)."""
    w1, b1, w2, b2, w3, b3 = params
    hp = lax.Precision.HIGHEST
    h = jnp.maximum(jnp.dot(state, w1, precision=hp) + b1, 0.0)
    h = jnp.maximum(jnp.dot(h, w2, precision=hp) + b2, 0.0)
    return jnp.dot(h, w3.T, precision=hp) + b3


if __name__ == "__main__":
    key = jax.random.PRNGKey(0)
    k_params, k_state1, k_state2 = jax.random.split(key, 3)

    state_dim = 16
    hidden_dim = 32
    params = init_critic_params(k_params, state_dim, hidden_dim)

    # Small demo shape (single grid step).
    batch = 8
    state = jax.random.normal(k_state1, (batch, state_dim), jnp.float32)
    value = jax.block_until_ready(critic_forward(state, params))
    ref = critic_reference(state, params)
    assert value.shape == (batch, 1)
    assert jnp.allclose(value, ref, atol=1e-4, rtol=1e-4)

    # Ragged batch exercising padding + multi-step tiled grid + lane-dense output.
    batch2 = 400
    state2 = jax.random.normal(k_state2, (batch2, state_dim), jnp.float32)
    value2 = jax.block_until_ready(critic_forward(state2, params, block_b=128))
    ref2 = critic_reference(state2, params)
    assert value2.shape == (batch2, 1)
    assert jnp.allclose(value2, ref2, atol=1e-4, rtol=1e-4)

    print("KERNEL_OK")
</pallas_src>

<mosaic_0001>
module attributes {stable_mosaic.version = 11 : i64} {
  func.func @_critic_kernel(%arg0: i32, %arg1: memref<8x16xf32, #tpu.memory_space<vmem>>, %arg2: memref<16x32xf32, #tpu.memory_space<vmem>>, %arg3: memref<1x32xf32, #tpu.memory_space<vmem>>, %arg4: memref<32x32xf32, #tpu.memory_space<vmem>>, %arg5: memref<1x32xf32, #tpu.memory_space<vmem>>, %arg6: memref<1x32xf32, #tpu.memory_space<vmem>>, %arg7: memref<1x1xf32, #tpu.memory_space<vmem>>, %arg8: memref<1x8xf32, #tpu.memory_space<vmem>>) attributes {dimension_semantics = [#tpu.dimension_semantics<parallel>], iteration_bounds = array<i64: 1>, scalar_prefetch = 0 : i64, scratch_operands = 0 : i64, tpu.core_type = #tpu.core_type<tc>, window_params = [{transform_indices = @transform_0, window_bounds = array<i64: 8, 16>}, {pipeline_mode = #tpu.pipeline_mode<synchronous>, transform_indices = @transform_1, window_bounds = array<i64: 16, 32>}, {pipeline_mode = #tpu.pipeline_mode<synchronous>, transform_indices = @transform_2, window_bounds = array<i64: 1, 32>}, {pipeline_mode = #tpu.pipeline_mode<synchronous>, transform_indices = @transform_3, window_bounds = array<i64: 32, 32>}, {pipeline_mode = #tpu.pipeline_mode<synchronous>, transform_indices = @transform_4, window_bounds = array<i64: 1, 32>}, {pipeline_mode = #tpu.pipeline_mode<synchronous>, transform_indices = @transform_5, window_bounds = array<i64: 1, 32>}, {pipeline_mode = #tpu.pipeline_mode<synchronous>, transform_indices = @transform_6, window_bounds = array<i64: 1, 1>}, {transform_indices = @transform_7, window_bounds = array<i64: 1, 8>}]} {
    %c0 = arith.constant 0 : index
    %c0_0 = arith.constant 0 : index
    %0 = vector.load %arg1[%c0, %c0_0] : memref<8x16xf32, #tpu.memory_space<vmem>>, vector<8x16xf32>
    %c0_1 = arith.constant 0 : index
    %c0_2 = arith.constant 0 : index
    %1 = vector.load %arg3[%c0_1, %c0_2] : memref<1x32xf32, #tpu.memory_space<vmem>>, vector<1x32xf32>
    %c0_3 = arith.constant 0 : index
    %c0_4 = arith.constant 0 : index
    %2 = vector.load %arg5[%c0_3, %c0_4] : memref<1x32xf32, #tpu.memory_space<vmem>>, vector<1x32xf32>
    %c0_5 = arith.constant 0 : index
    %c0_6 = arith.constant 0 : index
    %3 = vector.load %arg6[%c0_5, %c0_6] : memref<1x32xf32, #tpu.memory_space<vmem>>, vector<1x32xf32>
    %c0_7 = arith.constant 0 : index
    %c0_8 = arith.constant 0 : index
    %4 = vector.load %arg7[%c0_7, %c0_8] : memref<1x1xf32, #tpu.memory_space<vmem>>, vector<1x1xf32>
    %c0_9 = arith.constant 0 : index
    %c0_10 = arith.constant 0 : index
    %5 = vector.load %arg2[%c0_9, %c0_10] : memref<16x32xf32, #tpu.memory_space<vmem>>, vector<16x32xf32>
    %cst = arith.constant dense<0.000000e+00> : vector<8x32xf32>
    %6 = tpu.matmul %0, %5, %cst {dimension_numbers = #tpu.dot_dimension_numbers<[1], [0], [0], [1], [0, 0, 1, 1], [], []>} : vector<8x16xf32>, vector<16x32xf32>, vector<8x32xf32> -> vector<8x32xf32>
    %7 = vector.broadcast %1 : vector<1x32xf32> to vector<8x32xf32>
    %8 = arith.addf %6, %7 : vector<8x32xf32>
    %cst_11 = arith.constant 0.000000e+00 : f32
    %9 = vector.broadcast %cst_11 : f32 to vector<8x32xf32>
    %10 = arith.maximumf %8, %9 : vector<8x32xf32>
    %c0_12 = arith.constant 0 : index
    %c0_13 = arith.constant 0 : index
    %11 = vector.load %arg4[%c0_12, %c0_13] : memref<32x32xf32, #tpu.memory_space<vmem>>, vector<32x32xf32>
    %cst_14 = arith.constant dense<0.000000e+00> : vector<8x32xf32>
    %12 = tpu.matmul %10, %11, %cst_14 {dimension_numbers = #tpu.dot_dimension_numbers<[1], [0], [0], [1], [0, 0, 1, 1], [], []>} : vector<8x32xf32>, vector<32x32xf32>, vector<8x32xf32> -> vector<8x32xf32>
    %13 = vector.broadcast %2 : vector<1x32xf32> to vector<8x32xf32>
    %14 = arith.addf %12, %13 : vector<8x32xf32>
    %cst_15 = arith.constant 0.000000e+00 : f32
    %15 = vector.broadcast %cst_15 : f32 to vector<8x32xf32>
    %16 = arith.maximumf %14, %15 : vector<8x32xf32>
    %cst_16 = arith.constant dense<0.000000e+00> : vector<1x8xf32>
    %17 = tpu.matmul %3, %16, %cst_16 {dimension_numbers = #tpu.dot_dimension_numbers<[1], [1], [0], [0], [0, 0, 1, 0], [], []>} : vector<1x32xf32>, vector<8x32xf32>, vector<1x8xf32> -> vector<1x8xf32>
    %18 = vector.broadcast %4 : vector<1x1xf32> to vector<1x8xf32>
    %19 = arith.addf %17, %18 : vector<1x8xf32>
    %c0_17 = arith.constant 0 : index
    %c0_18 = arith.constant 0 : index
    %20 = vector.load %arg8[%c0_17, %c0_18] : memref<1x8xf32, #tpu.memory_space<vmem>>, vector<1x8xf32>
    tpu.vector_store %arg8[%c0_17, %c0_18], %19 {strides = array<i32>} : memref<1x8xf32, #tpu.memory_space<vmem>>, vector<1x8xf32>,
    return
  }
  func.func @transform_0(%arg0: i32) -> (i32, i32) {
    %c0_i32 = arith.constant 0 : i32
    %c0_i32_0 = arith.constant 0 : i32
    return %arg0, %c0_i32 : i32, i32
  }
  func.func @transform_1(%arg0: i32) -> (i32, i32) {
    %c0_i32 = arith.constant 0 : i32
    %c0_i32_0 = arith.constant 0 : i32
    %c0_i32_1 = arith.constant 0 : i32
    return %c0_i32, %c0_i32_0 : i32, i32
  }
  func.func @transform_2(%arg0: i32) -> (i32, i32) {
    %c0_i32 = arith.constant 0 : i32
    %c0_i32_0 = arith.constant 0 : i32
    %c0_i32_1 = arith.constant 0 : i32
    return %c0_i32, %c0_i32_0 : i32, i32
  }
  func.func @transform_3(%arg0: i32) -> (i32, i32) {
    %c0_i32 = arith.constant 0 : i32
    %c0_i32_0 = arith.constant 0 : i32
    %c0_i32_1 = arith.constant 0 : i32
    return %c0_i32, %c0_i32_0 : i32, i32
  }
  func.func @transform_4(%arg0: i32) -> (i32, i32) {
    %c0_i32 = arith.constant 0 : i32
    %c0_i32_0 = arith.constant 0 : i32
    %c0_i32_1 = arith.constant 0 : i32
    return %c0_i32, %c0_i32_0 : i32, i32
  }
  func.func @transform_5(%arg0: i32) -> (i32, i32) {
    %c0_i32 = arith.constant 0 : i32
    %c0_i32_0 = arith.constant 0 : i32
    %c0_i32_1 = arith.constant 0 : i32
    return %c0_i32, %c0_i32_0 : i32, i32
  }
  func.func @transform_6(%arg0: i32) -> (i32, i32) {
    %c0_i32 = arith.constant 0 : i32
    %c0_i32_0 = arith.constant 0 : i32
    %c0_i32_1 = arith.constant 0 : i32
    return %c0_i32, %c0_i32_0 : i32, i32
  }
  func.func @transform_7(%arg0: i32) -> (i32, i32) {
    %c0_i32 = arith.constant 0 : i32
    %c0_i32_0 = arith.constant 0 : i32
    return %c0_i32, %arg0 : i32, i32
  }
}

</mosaic_0001>

<llo_original>
// kernel: critic_forward.1
$region0: #{critic_forward.1}
  #allocation0 [shape = 'u32[]', space=smem, size = 0x4, offset = 0x4, fixed_abs, tag = 'smem constant byte address 0x4 - core index']
  #allocation1 [shape = 'u32[144,128]{1,0:T(1,128)}', space=vmem, size = 0x12000, scoped, tag = 'internal scratch']
  #allocation2 [shape = 'f32[1,1]{1,0:T(1,128)S(1)}', space=vmem, size = 0x200, scoped, tag = 'scoped memory for critic_forward.1']
  %s0 = inlined_call_operand.hbm [shape: f32[8,16], index: 0, kind: input, shape index: {}]
  %s1 = inlined_call_operand.hbm [shape: f32[16,32], index: 1, kind: input, shape index: {}]
  %s2 = inlined_call_operand.vmem [shape: f32[1,32], index: 2, kind: input, shape index: {}]
  %s3 = inlined_call_operand.hbm [shape: f32[32,32], index: 3, kind: input, shape index: {}]
  %s4 = inlined_call_operand.vmem [shape: f32[1,32], index: 4, kind: input, shape index: {}]
  %s5 = inlined_call_operand.vmem [shape: f32[1,32], index: 5, kind: input, shape index: {}]
  %s6 = inlined_call_operand.<no memory space> [shape: f32[1,1], index: 6, kind: input, shape index: {}]
  %s7 = inlined_call_operand.hbm [shape: f32[1,8], index: 7, kind: output, shape index: {}]
  %s8 = sld [smem:[#allocation0]]
  $region50: #{critic_forward.1} parent=0
    _
  %s10 = ssub.s32 1, %s8
  %s11 = scalar_select 0, %s10, %s8
  %v12 = vstv %s6
  %13 = vst [vmem:[#allocation2] sm:$0x1] %v12
  $region1: #{critic_forward.1} parent=0
    #allocation3 [shape = 'u8[4096]{0}', space=vmem, size = 0x1000, scoped, tag = 'input window, operand 0, single buffered']
    #allocation4 [shape = 's32[1]{0}', space=sflag, size = 0x4, scoped, tag = 'scoped memory for critic_forward.1']
    #allocation5 [shape = 's32[1]{0}', space=sflag, size = 0x4, scoped, tag = 'scoped memory for critic_forward.1']
    #allocation6 [shape = 'u8[8192]{0}', space=vmem, size = 0x2000, scoped, tag = 'input window, operand 1, single buffered']
    #allocation7 [shape = 's32[1]{0}', space=sflag, size = 0x4, scoped, tag = 'scoped memory for critic_forward.1']
    #allocation8 [shape = 'u8[16384]{0}', space=vmem, size = 0x4000, scoped, tag = 'input window, operand 3, single buffered']
    #allocation9 [shape = 'u8[512]{0}', space=vmem, size = 0x400, scoped, tag = 'output window, operand 0, single buffered']
    %14 = vsyncpa [#allocation4], 0
    %15 = vsyncpa [#allocation7], 0
    %16 = vsyncpa [#allocation5], 0
    // Predicated region
    $region2: #{critic_forward.1} parent=1 // pred_check
      _
    $region3: #{critic_forward.1} parent=1 // pred_check_branch
      %18 = sbr.rel (0) target = $region5
    $region4: #{critic_forward.1} parent=1 // pred_region
      %s20 = ssub.s32 128, 128
      %21 = vsyncadd [#allocation4], %s20
      %s23 = sshll.u32 [#allocation3], 4
      %s24 = int_to_ptr.vmem [resolvable:$true] %s23
      %26 = dma.hbm_to_vmem [thread:$0]  %s0, 128, %s24, [#allocation4]
    $region5: #{critic_forward.1} parent=1 // pred_fallthru
      _
    // Predicated region
    $region6: #{critic_forward.1} parent=1 // pred_check
      _
    $region7: #{critic_forward.1} parent=1 // pred_check_branch
      %28 = sbr.rel (0) target = $region9
    $region8: #{critic_forward.1} parent=1 // pred_region
      %s30 = ssub.s32 256, 256
      %31 = vsyncadd [#allocation7], %s30
      %s32 = sshll.u32 [#allocation6], 4
      %s33 = int_to_ptr.vmem [resolvable:$true] %s32
      %38 = dma.hbm_to_vmem [thread:$0]  %s1, 256, %s33, [#allocation7], 128, 128, 8
    $region9: #{critic_forward.1} parent=1 // pred_fallthru
      _
    // Predicated region
    $region10: #{critic_forward.1} parent=1 // pred_check
      _
    $region11: #{critic_forward.1} parent=1 // pred_check_branch
      %40 = sbr.rel (0) target = $region13
    $region12: #{critic_forward.1} parent=1 // pred_region
      _
    $region13: #{critic_forward.1} parent=1 // pred_fallthru
      _
    // Predicated region
    $region14: #{critic_forward.1} parent=1 // pred_check
      _
    $region15: #{critic_forward.1} parent=1 // pred_check_branch
      %42 = sbr.rel (0) target = $region17
    $region16: #{critic_forward.1} parent=1 // pred_region
      %s44 = ssub.s32 512, 512
      %45 = vsyncadd [#allocation7], %s44
      %s46 = sshll.u32 [#allocation8], 4
      %s47 = int_to_ptr.vmem [resolvable:$true] %s46
      %52 = dma.hbm_to_vmem [thread:$0]  %s3, 512, %s47, [#allocation7], 128, 128, 8
    $region17: #{critic_forward.1} parent=1 // pred_fallthru
      _
    // Predicated region
    $region18: #{critic_forward.1} parent=1 // pred_check
      _
    $region19: #{critic_forward.1} parent=1 // pred_check_branch
      %54 = sbr.rel (0) target = $region21
    $region20: #{critic_forward.1} parent=1 // pred_region
      _
    $region21: #{critic_forward.1} parent=1 // pred_fallthru
      _
    // Predicated region
    $region22: #{critic_forward.1} parent=1 // pred_check
      _
    $region23: #{critic_forward.1} parent=1 // pred_check_branch
      %56 = sbr.rel (0) target = $region25
    $region24: #{critic_forward.1} parent=1 // pred_region
      _
    $region25: #{critic_forward.1} parent=1 // pred_fallthru
      _
    // Predicated region
    $region26: #{critic_forward.1} parent=1 // pred_check
      _
    $region27: #{critic_forward.1} parent=1 // pred_check_branch
      %58 = sbr.rel (0) target = $region29
    $region28: #{critic_forward.1} parent=1 // pred_region
      _
    $region29: #{critic_forward.1} parent=1 // pred_fallthru
      _
    // Predicated region
    $region30: #{critic_forward.1} parent=1 // pred_check
      _
    $region31: #{critic_forward.1} parent=1 // pred_check_branch
      %60 = sbr.rel (0) target = $region33
    $region32: #{critic_forward.1} parent=1 // pred_region
      %61 = dma.done [#allocation4], 128
    $region33: #{critic_forward.1} parent=1 // pred_fallthru
      _
    // Predicated region
    $region34: #{critic_forward.1} parent=1 // pred_check
      _
    $region35: #{critic_forward.1} parent=1 // pred_check_branch
      %63 = sbr.rel (0) target = $region37
    $region36: #{critic_forward.1} parent=1 // pred_region
      %64 = dma.done [#allocation7], 256
    $region37: #{critic_forward.1} parent=1 // pred_fallthru
      _
    // Predicated region
    $region38: #{critic_forward.1} parent=1 // pred_check
      _
    $region39: #{critic_forward.1} parent=1 // pred_check_branch
      %66 = sbr.rel (0) target = $region41
    $region40: #{critic_forward.1} parent=1 // pred_region
      %67 = dma.done [#allocation7], 512
    $region41: #{critic_forward.1} parent=1 // pred_fallthru
      _
    %v68 = vld [vmem:[#allocation3] sm:$0xff]
    %v69 = vld [vmem:[%s2] sm:$0x1]
    %v70 = vld [vmem:[%s4] sm:$0x1]
    %v71 = vld [vmem:[%s5] sm:$0x1]
    %v72 = vld [vmem:[#allocation2] sm:$0x1]
    %v73 = vld [vmem:[#allocation6] sm:$0xff]
    %v74 = vld [vmem:[#allocation6 + $0x8] sm:$0xff]
    %v76 = vlaneseq
    %v77 = vshrl.u32 %v76, 7
    %v78 = vsub.s32 0, %v77
    %v79 = vrot.slane %v69, %v78
    %vm81 = vcmask 130048
    %v83 = vsel %vm81, %v68, 0
    %85 = vmatprep.subr.mxu0 0.0
    %86 = vmatpush1.msra.mxu0 %v73
    %87 = vmatprep.subr.mxu0 0.0
    %88 = vmatpush1.msra.mxu0 %v74
    %89 = vmatprep.subr.mxu0 0.0
    %90 = vmatpush1.msra.mxu0 0.0
    %91 = vmatprep.subr.mxu0 0.0
    %92 = vmatpush1.msra.mxu0 0.0
    %93 = vmatprep.subr.mxu0 0.0
    %94 = vmatpush1.msra.mxu0 0.0
    %95 = vmatprep.subr.mxu0 0.0
    %96 = vmatpush1.msra.mxu0 0.0
    %97 = vmatprep.subr.mxu0 0.0
    %98 = vmatpush1.msra.mxu0 0.0
    %99 = vmatprep.subr.mxu0 0.0
    %100 = vmatpush1.msra.mxu0 0.0
    %101 = vmatprep.subr.mxu0 0.0
    %102 = vmatpush1.msra.mxu0 0.0
    %103 = vmatprep.subr.mxu0 0.0
    %104 = vmatpush1.msra.mxu0 0.0
    %105 = vmatprep.subr.mxu0 0.0
    %106 = vmatpush1.msra.mxu0 0.0
    %107 = vmatprep.subr.mxu0 0.0
    %108 = vmatpush1.msra.mxu0 0.0
    %109 = vmatprep.subr.mxu0 0.0
    %110 = vmatpush1.msra.mxu0 0.0
    %111 = vmatprep.subr.mxu0 0.0
    %112 = vmatpush1.msra.mxu0 0.0
    %113 = vmatprep.subr.mxu0 0.0
    %114 = vmatpush1.msra.mxu0 0.0
    %115 = vmatprep.subr.mxu0 0.0
    %116 = vmatpush1.msra.mxu0 0.0
    %117 = vmatprep.subr.mxu0 0.0
    %118 = vmatpush1.msra.mxu0 0.0
    %119 = vmatprep.subr.mxu0 0.0
    %120 = vmatpush1.msra.mxu0 0.0
    %121 = vmatprep.subr.mxu0 0.0
    %122 = vmatpush1.msra.mxu0 0.0
    %123 = vmatprep.subr.mxu0 0.0
    %124 = vmatpush1.msra.mxu0 0.0
    %125 = vmatprep.subr.mxu0 0.0
    %126 = vmatpush1.msra.mxu0 0.0
    %127 = vmatprep.subr.mxu0 0.0
    %128 = vmatpush1.msra.mxu0 0.0
    %129 = vmatprep.subr.mxu0 0.0
    %130 = vmatpush1.msra.mxu0 0.0
    %131 = vmatprep.subr.mxu0 0.0
    %132 = vmatpush1.msra.mxu0 0.0
    %133 = vmatprep.subr.mxu0 0.0
    %134 = vmatpush1.msra.mxu0 0.0
    %135 = vmatprep.subr.mxu0 0.0
    %136 = vmatpush1.msra.mxu0 0.0
    %137 = vmatprep.subr.mxu0 0.0
    %138 = vmatpush1.msra.mxu0 0.0
    %139 = vmatprep.subr.mxu0 0.0
    %140 = vmatpush1.msra.mxu0 0.0
    %141 = vmatprep.subr.mxu0 0.0
    %142 = vmatpush1.msra.mxu0 0.0
    %143 = vmatprep.subr.mxu0 0.0
    %144 = vmatpush1.msra.mxu0 0.0
    %145 = vmatprep.subr.mxu0 0.0
    %146 = vmatpush1.msra.mxu0 0.0
    %147 = vmatprep.subr.mxu0 0.0
    %148 = vmatpush1.msra.mxu0 0.0
    %149 = vmatprep.mubr.f32.mxu0 0.0
    %150 = vmatmul.mubr.f32.gmra.mrb[0].mxu0 %v83
    %v151 = vpop.f32.mrb[0].mxu0
    %v152 = vadd.f32 %v79, %v151
    %v153 = vpop.f32.mrb[0].mxu0
    %154 = vdwg.mxu0
    %v155 = vmax.f32 %v152, 0.0
    %v156 = vld [vmem:[#allocation8] sm:$0xff]
    %v157 = vld [vmem:[#allocation8 + $0x8] sm:$0xff]
    %v158 = vld [vmem:[#allocation8 + $0x10] sm:$0xff]
    %v159 = vld [vmem:[#allocation8 + $0x18] sm:$0xff]
    %v161 = vlaneseq
    %v162 = vshrl.u32 %v161, 7
    %v163 = vsub.s32 0, %v162
    %v164 = vrot.slane %v70, %v163
    %vm166 = vcmask 261120
    %v168 = vsel %vm166, %v155, 0
    %170 = vmatprep.subr.mxu0 0.0
    %171 = vmatpush1.msra.mxu0 %v156
    %172 = vmatprep.subr.mxu0 0.0
    %173 = vmatpush1.msra.mxu0 %v157
    %174 = vmatprep.subr.mxu0 0.0
    %175 = vmatpush1.msra.mxu0 %v158
    %176 = vmatprep.subr.mxu0 0.0
    %177 = vmatpush1.msra.mxu0 %v159
    %178 = vmatprep.subr.mxu0 0.0
    %179 = vmatpush1.msra.mxu0 0.0
    %180 = vmatprep.subr.mxu0 0.0
    %181 = vmatpush1.msra.mxu0 0.0
    %182 = vmatprep.subr.mxu0 0.0
    %183 = vmatpush1.msra.mxu0 0.0
    %184 = vmatprep.subr.mxu0 0.0
    %185 = vmatpush1.msra.mxu0 0.0
    %186 = vmatprep.subr.mxu0 0.0
    %187 = vmatpush1.msra.mxu0 0.0
    %188 = vmatprep.subr.mxu0 0.0
    %189 = vmatpush1.msra.mxu0 0.0
    %190 = vmatprep.subr.mxu0 0.0
    %191 = vmatpush1.msra.mxu0 0.0
    %192 = vmatprep.subr.mxu0 0.0
    %193 = vmatpush1.msra.mxu0 0.0
    %194 = vmatprep.subr.mxu0 0.0
    %195 = vmatpush1.msra.mxu0 0.0
    %196 = vmatprep.subr.mxu0 0.0
    %197 = vmatpush1.msra.mxu0 0.0
    %198 = vmatprep.subr.mxu0 0.0
    %199 = vmatpush1.msra.mxu0 0.0
    %200 = vmatprep.subr.mxu0 0.0
    %201 = vmatpush1.msra.mxu0 0.0
    %202 = vmatprep.subr.mxu0 0.0
    %203 = vmatpush1.msra.mxu0 0.0
    %204 = vmatprep.subr.mxu0 0.0
    %205 = vmatpush1.msra.mxu0 0.0
    %206 = vmatprep.subr.mxu0 0.0
    %207 = vmatpush1.msra.mxu0 0.0
    %208 = vmatprep.subr.mxu0 0.0
    %209 = vmatpush1.msra.mxu0 0.0
    %210 = vmatprep.subr.mxu0 0.0
    %211 = vmatpush1.msra.mxu0 0.0
    %212 = vmatprep.subr.mxu0 0.0
    %213 = vmatpush1.msra.mxu0 0.0
    %214 = vmatprep.subr.mxu0 0.0
    %215 = vmatpush1.msra.mxu0 0.0
    %216 = vmatprep.subr.mxu0 0.0
    %217 = vmatpush1.msra.mxu0 0.0
    %218 = vmatprep.subr.mxu0 0.0
    %219 = vmatpush1.msra.mxu0 0.0
    %220 = vmatprep.subr.mxu0 0.0
    %221 = vmatpush1.msra.mxu0 0.0
    %222 = vmatprep.subr.mxu0 0.0
    %223 = vmatpush1.msra.mxu0 0.0
    %224 = vmatprep.subr.mxu0 0.0
    %225 = vmatpush1.msra.mxu0 0.0
    %226 = vmatprep.subr.mxu0 0.0
    %227 = vmatpush1.msra.mxu0 0.0
    %228 = vmatprep.subr.mxu0 0.0
    %229 = vmatpush1.msra.mxu0 0.0
    %230 = vmatprep.subr.mxu0 0.0
    %231 = vmatpush1.msra.mxu0 0.0
    %232 = vmatprep.subr.mxu0 0.0
    %233 = vmatpush1.msra.mxu0 0.0
    %234 = vmatprep.mubr.f32.mxu0 0.0
    %235 = vmatmul.mubr.f32.gmra.mrb[0].mxu0 %v168
    %v236 = vpop.f32.mrb[0].mxu0
    %v237 = vadd.f32 %v164, %v236
    %v238 = vpop.f32.mrb[0].mxu0
    %239 = vdwg.mxu0
    %v240 = vmax.f32 %v237, 0.0
    %242 = vset.pattern.permute.xlu0 0
    %243 = vperm.xlu0 %242, %v72
    %v244 = vpop.permute.xlu0 %243
    %v246 = vlaneseq
    %v247 = vshrl.u32 %v246, 7
    %v248 = vsub.s32 0, %v247
    %v249 = vrot.slane %v244, %v248
    %v251 = vsel %vm166, %v71, 0
    %v254 = vsel %vm166, %v240, 0
    %256 = vmatprep.subr.mxu0 0.0
    %257 = vmatpush1.xpose.msra.mxu0 %v254
    %258 = vmatprep.subr.mxu0 0.0
    %259 = vmatpush1.xpose.msra.mxu0 0.0
    %260 = vmatprep.subr.mxu0 0.0
    %261 = vmatpush1.xpose.msra.mxu0 0.0
    %262 = vmatprep.subr.mxu0 0.0
    %263 = vmatpush1.xpose.msra.mxu0 0.0
    %264 = vmatprep.subr.mxu0 0.0
    %265 = vmatpush1.xpose.msra.mxu0 0.0
    %266 = vmatprep.subr.mxu0 0.0
    %267 = vmatpush1.xpose.msra.mxu0 0.0
    %268 = vmatprep.subr.mxu0 0.0
    %269 = vmatpush1.xpose.msra.mxu0 0.0
    %270 = vmatprep.subr.mxu0 0.0
    %271 = vmatpush1.xpose.msra.mxu0 0.0
    %272 = vmatprep.subr.mxu0 0.0
    %273 = vmatpush1.xpose.msra.mxu0 0.0
    %274 = vmatprep.subr.mxu0 0.0
    %275 = vmatpush1.xpose.msra.mxu0 0.0
    %276 = vmatprep.subr.mxu0 0.0
    %277 = vmatpush1.xpose.msra.mxu0 0.0
    %278 = vmatprep.subr.mxu0 0.0
    %279 = vmatpush1.xpose.msra.mxu0 0.0
    %280 = vmatprep.subr.mxu0 0.0
    %281 = vmatpush1.xpose.msra.mxu0 0.0
    %282 = vmatprep.subr.mxu0 0.0
    %283 = vmatpush1.xpose.msra.mxu0 0.0
    %284 = vmatprep.subr.mxu0 0.0
    %285 = vmatpush1.xpose.msra.mxu0 0.0
    %286 = vmatprep.subr.mxu0 0.0
    %287 = vmatpush1.xpose.msra.mxu0 0.0
    %288 = vmatprep.subr.mxu0 0.0
    %289 = vmatpush1.xpose.msra.mxu0 0.0
    %290 = vmatprep.subr.mxu0 0.0
    %291 = vmatpush1.xpose.msra.mxu0 0.0
    %292 = vmatprep.subr.mxu0 0.0
    %293 = vmatpush1.xpose.msra.mxu0 0.0
    %294 = vmatprep.subr.mxu0 0.0
    %295 = vmatpush1.xpose.msra.mxu0 0.0
    %296 = vmatprep.subr.mxu0 0.0
    %297 = vmatpush1.xpose.msra.mxu0 0.0
    %298 = vmatprep.subr.mxu0 0.0
    %299 = vmatpush1.xpose.msra.mxu0 0.0
    %300 = vmatprep.subr.mxu0 0.0
    %301 = vmatpush1.xpose.msra.mxu0 0.0
    %302 = vmatprep.subr.mxu0 0.0
    %303 = vmatpush1.xpose.msra.mxu0 0.0
    %304 = vmatprep.subr.mxu0 0.0
    %305 = vmatpush1.xpose.msra.mxu0 0.0
    %306 = vmatprep.subr.mxu0 0.0
    %307 = vmatpush1.xpose.msra.mxu0 0.0
    %308 = vmatprep.subr.mxu0 0.0
    %309 = vmatpush1.xpose.msra.mxu0 0.0
    %310 = vmatprep.subr.mxu0 0.0
    %311 = vmatpush1.xpose.msra.mxu0 0.0
    %312 = vmatprep.subr.mxu0 0.0
    %313 = vmatpush1.xpose.msra.mxu0 0.0
    %314 = vmatprep.subr.mxu0 0.0
    %315 = vmatpush1.xpose.msra.mxu0 0.0
    %316 = vmatprep.subr.mxu0 0.0
    %317 = vmatpush1.xpose.msra.mxu0 0.0
    %318 = vmatprep.subr.mxu0 0.0
    %319 = vmatpush1.xpose.msra.mxu0 0.0
    %320 = vmatprep.mubr.f32.mxu0 0.0
    %321 = vmatmul.mubr.f32.gmra.mrb[0].mxu0 %v251
    %v322 = vpop.f32.mrb[0].mxu0
    %v323 = vadd.f32 %v249, %v322
    %v324 = vpop.f32.mrb[0].mxu0
    %325 = vdwg.mxu0
    %vm326 = vcmask 57344
    %327 = vst.msk [vmem:[#allocation9] sm:$0x1] %vm326, %v323
    // Predicated region
    $region42: #{critic_forward.1} parent=1 // pred_check
      _
    $region43: #{critic_forward.1} parent=1 // pred_check_branch
      %329 = sbr.rel (0) target = $region45
    $region44: #{critic_forward.1} parent=1 // pred_region
      %s331 = ssub.s32 16, 16
      %332 = vsyncadd [#allocation5], %s331
      %s334 = sshll.u32 [#allocation9], 4
      %s335 = int_to_ptr.vmem [resolvable:$true] %s334
      %337 = dma.vmem_to_hbm [thread:$0]  %s335, 16, %s7, [#allocation5]
    $region45: #{critic_forward.1} parent=1 // pred_fallthru
      _
    // Predicated region
    $region46: #{critic_forward.1} parent=1 // pred_check
      _
    $region47: #{critic_forward.1} parent=1 // pred_check_branch
      %339 = sbr.rel (0) target = $region49
    $region48: #{critic_forward.1} parent=1 // pred_region
      %340 = dma.done [#allocation5], 16
    $region49: #{critic_forward.1} parent=1 // pred_fallthru
      _
    %341 = vsyncpa [#allocation4], 1
    %342 = vsyncpa [#allocation7], 1
    %343 = vsyncpa [#allocation5], 1

</llo_original>
